<compile_context>
chip_gen: v5e
topology: v5e:2x2
jax: 0.10.0
libtpu: 0.0.40
codegen_flags: <defaults>
</compile_context>

<pallas_src>
import jax
import jax.numpy as jnp
from jax.experimental import pallas as pl
from jax.experimental.pallas import tpu as pltpu

TILE_M = 1024     # node-row tile (rows of x / a_hat / out)
TILE_K = 2048     # contraction tile over a_hat columns (== rows of hw); multiple of TILE_M
LANE = 128        # pad channel dims to the 128-lane width
NODE_PAD = 256    # minimum node-dim padding granularity (keeps tiny graphs cheap)


def _round_up(n, m):
    return (n + m - 1) // m * m


def _pad2(a, rows, cols):
    return jnp.pad(a, ((0, rows - a.shape[0]), (0, cols - a.shape[1])))


# ------------- kernel 1: h1 = relu(x @ W1 + b1);  hw = h1 @ W2 -----------------
def lin_in_kernel(x_ref, w1_ref, b1_ref, w2_ref, hw_ref):
    # bf16 x bf16 -> f32 accumulate on the MXU
    h1 = jnp.dot(x_ref[...], w1_ref[...], preferred_element_type=jnp.float32)
    h1 = jnp.maximum(h1 + b1_ref[...], 0.0)
    hw = jnp.dot(h1.astype(jnp.bfloat16), w2_ref[...],
                 preferred_element_type=jnp.float32)
    hw_ref[...] = hw.astype(hw_ref.dtype)


# --------- kernel 2: out = relu(A_hat @ hw + b2) @ W3 + b3  (K-tiled) ----------
def gcn_agg_cls_kernel(a_ref, hw_ref, b2_ref, w3_ref, b3_ref, out_ref, acc_ref):
    k = pl.program_id(1)

    @pl.when(k == 0)
    def _():
        acc_ref[...] = jnp.zeros_like(acc_ref)

    # bf16 x bf16 -> f32 accumulate on the MXU
    acc_ref[...] += jnp.dot(a_ref[...], hw_ref[...],
                            preferred_element_type=jnp.float32)

    @pl.when(k == pl.num_programs(1) - 1)
    def _():
        h2 = jnp.maximum(acc_ref[...] + b2_ref[...], 0.0)
        y = jnp.dot(h2.astype(jnp.bfloat16), w3_ref[...],
                    preferred_element_type=jnp.float32) + b3_ref[...]
        out_ref[...] = y.astype(out_ref.dtype)


def pyg_gcn_forward(x, edge_index, params, edge_weight=None):
    """x: [N, in_channels] f32, edge_index: [2, E] int32."""
    N, in_channels = x.shape
    w1, b1, w2, b2, w3, b3 = params
    out_channels = w1.shape[1]
    num_class = w3.shape[1]

    # ---- tile sizes (clamped for small graphs); n_pad divisible by both ----
    tile_m = min(TILE_M, _round_up(N, NODE_PAD))
    tile_k = min(TILE_K, _round_up(N, tile_m))
    tile_k = (tile_k // tile_m) * tile_m            # keep tile_k a multiple of tile_m
    n_pad = _round_up(N, tile_k)

    c_p = _round_up(out_channels, LANE)
    ncls_p = _round_up(num_class, LANE)

    # ---- glue: normalized dense adjacency (PyG gcn_norm semantics) ----
    row, col = edge_index[0], edge_index[1]
    E = row.shape[0]
    ew = jnp.ones((E,), jnp.float32) if edge_weight is None else edge_weight.astype(jnp.float32)
    loop = jnp.arange(N, dtype=edge_index.dtype)
    row = jnp.concatenate([row, loop])
    col = jnp.concatenate([col, loop])
    ew = jnp.concatenate([ew, jnp.ones((N,), jnp.float32)])
    deg = jnp.zeros((N,), jnp.float32).at[col].add(ew)
    dinv = jnp.where(deg > 0, 1.0 / jnp.sqrt(deg), 0.0)
    norm = dinv[row] * ew * dinv[col]
    # aggregation target is `col`: out[col] += norm * src[row]  =>  A_hat[col, row].
    # Scatter in f32 at NxN (duplicate edges accumulate exactly), then one cast+pad to bf16.
    a_f32 = jnp.zeros((N, N), jnp.float32).at[col, row].add(norm)
    a_hat = _pad2(a_f32.astype(jnp.bfloat16), n_pad, n_pad)   # padded region is exactly zero
    # TODO(synk): for static graphs hoist/cache a_hat out of the forward; for large sparse
    # graphs replace dense a_hat with block-sparse streaming (PrefetchScalarGridSpec with
    # per-row-block nonzero column-block lists + data-dependent index_map over K).

    # ---- pad operands; MXU operands in bf16 (f32 MXU is emulated), biases in f32 ----
    x_p = jnp.pad(x.astype(jnp.bfloat16), ((0, n_pad - N), (0, 0)))  # in_channels unpadded
    w1_p = _pad2(w1, in_channels, c_p).astype(jnp.bfloat16)
    b1_p = _pad2(b1.reshape(1, -1), 1, c_p)
    w2_p = _pad2(w2, c_p, c_p).astype(jnp.bfloat16)
    b2_p = _pad2(b2.reshape(1, -1), 1, c_p)
    w3_p = _pad2(w3, c_p, ncls_p).astype(jnp.bfloat16)
    b3_p = _pad2(b3.reshape(1, -1), 1, ncls_p)

    n_row_tiles = n_pad // tile_m
    n_k_tiles = n_pad // tile_k

    # ---- kernel 1: row-tiled linear_transform_in + GCN lin (hw in bf16) ----
    hw = pl.pallas_call(
        lin_in_kernel,
        out_shape=jax.ShapeDtypeStruct((n_pad, c_p), jnp.bfloat16),
        grid_spec=pltpu.PrefetchScalarGridSpec(
            num_scalar_prefetch=0,
            grid=(n_row_tiles,),
            in_specs=[
                pl.BlockSpec((tile_m, in_channels), lambda i: (i, 0)),  # x row tile
                pl.BlockSpec((in_channels, c_p), lambda i: (0, 0)),     # W1 (resident)
                pl.BlockSpec((1, c_p), lambda i: (0, 0)),               # b1
                pl.BlockSpec((c_p, c_p), lambda i: (0, 0)),             # W2 (resident)
            ],
            out_specs=pl.BlockSpec((tile_m, c_p), lambda i: (i, 0)),
        ),
        compiler_params=pltpu.CompilerParams(
            dimension_semantics=("parallel",),
            vmem_limit_bytes=32 * 1024 * 1024,
        ),
    )(x_p, w1_p, b1_p, w2_p)

    # ---- kernel 2: row-tiled + K-tiled A_hat @ hw, then ReLU + classifier ----
    flops = 2 * n_pad * n_pad * c_p + 2 * n_pad * c_p * ncls_p
    bytes_accessed = (n_pad * n_pad * 2                      # a_hat (bf16, read once)
                      + n_row_tiles * n_pad * c_p * 2        # hw (bf16, re-read per row tile)
                      + n_pad * ncls_p * 4                   # out (f32)
                      + c_p * ncls_p * 2 + (c_p + ncls_p) * 4)
    out_p = pl.pallas_call(
        gcn_agg_cls_kernel,
        out_shape=jax.ShapeDtypeStruct((n_pad, ncls_p), jnp.float32),
        grid_spec=pltpu.PrefetchScalarGridSpec(
            num_scalar_prefetch=0,
            grid=(n_row_tiles, n_k_tiles),
            in_specs=[
                pl.BlockSpec((tile_m, tile_k), lambda i, k: (i, k)),   # A_hat tile
                pl.BlockSpec((tile_k, c_p), lambda i, k: (k, 0)),      # hw K-slab
                pl.BlockSpec((1, c_p), lambda i, k: (0, 0)),           # b2
                pl.BlockSpec((c_p, ncls_p), lambda i, k: (0, 0)),      # W3
                pl.BlockSpec((1, ncls_p), lambda i, k: (0, 0)),        # b3
            ],
            out_specs=pl.BlockSpec((tile_m, ncls_p), lambda i, k: (i, 0)),
            scratch_shapes=[pltpu.VMEM((tile_m, c_p), jnp.float32)],
        ),
        compiler_params=pltpu.CompilerParams(
            dimension_semantics=("parallel", "arbitrary"),
            vmem_limit_bytes=32 * 1024 * 1024,
        ),
        cost_estimate=pl.CostEstimate(
            flops=flops, transcendentals=0, bytes_accessed=bytes_accessed),
    )(a_hat, hw, b2_p, w3_p, b3_p)

    return out_p[:N, :num_class]


def init_params(key, in_channels, out_channels, num_class):
    ks = jax.random.split(key, 6)

    def lin(kw, kb, fan_in, fan_out):
        bound = 1.0 / jnp.sqrt(fan_in)
        w = jax.random.uniform(kw, (fan_in, fan_out), jnp.float32, -bound, bound)
        b = jax.random.uniform(kb, (fan_out,), jnp.float32, -bound, bound)
        return w, b

    w1, b1 = lin(ks[0], ks[1], in_channels, out_channels)   # linear_transform_in
    w2, b2 = lin(ks[2], ks[3], out_channels, out_channels)  # GCNConv lin weight + bias
    w3, b3 = lin(ks[4], ks[5], out_channels, num_class)     # linear_cls_out
    return (w1, b1, w2, b2, w3, b3)


if __name__ == "__main__":
    key = jax.random.PRNGKey(0)
    k_x, k_e, k_p = jax.random.split(key, 3)

    N = 16            # number of graph nodes
    in_channels = 8
    out_channels = 32
    num_class = 8
    E = 32            # number of directed edges

    x = jax.random.normal(k_x, (N, in_channels), jnp.float32)
    edge_index = jax.random.randint(k_e, (2, E), 0, N, jnp.int32)
    params = init_params(k_p, in_channels, out_channels, num_class)

    y_hat = pyg_gcn_forward(x, edge_index, params)
    jax.block_until_ready(y_hat)
    assert y_hat.shape == (N, num_class)
    print("KERNEL_OK")
</pallas_src>

<mosaic_0001>
module attributes {stable_mosaic.version = 11 : i64} {
  func.func @lin_in_kernel(%arg0: i32, %arg1: memref<256x8xbf16, #tpu.memory_space<vmem>>, %arg2: memref<8x128xbf16, #tpu.memory_space<vmem>>, %arg3: memref<1x128xf32, #tpu.memory_space<vmem>>, %arg4: memref<128x128xbf16, #tpu.memory_space<vmem>>, %arg5: memref<256x128xbf16, #tpu.memory_space<vmem>>) attributes {dimension_semantics = [#tpu.dimension_semantics<parallel>], iteration_bounds = array<i64: 1>, scalar_prefetch = 0 : i64, scratch_operands = 0 : i64, tpu.core_type = #tpu.core_type<tc>, window_params = [{transform_indices = @transform_0, window_bounds = array<i64: 256, 8>}, {pipeline_mode = #tpu.pipeline_mode<synchronous>, transform_indices = @transform_1, window_bounds = array<i64: 8, 128>}, {pipeline_mode = #tpu.pipeline_mode<synchronous>, transform_indices = @transform_2, window_bounds = array<i64: 1, 128>}, {pipeline_mode = #tpu.pipeline_mode<synchronous>, transform_indices = @transform_3, window_bounds = array<i64: 128, 128>}, {transform_indices = @transform_4, window_bounds = array<i64: 256, 128>}]} {
    %c0 = arith.constant 0 : index
    %c0_0 = arith.constant 0 : index
    %0 = vector.load %arg1[%c0, %c0_0] : memref<256x8xbf16, #tpu.memory_space<vmem>>, vector<256x8xbf16>
    %c0_1 = arith.constant 0 : index
    %c0_2 = arith.constant 0 : index
    %1 = vector.load %arg2[%c0_1, %c0_2] : memref<8x128xbf16, #tpu.memory_space<vmem>>, vector<8x128xbf16>
    %cst = arith.constant dense<0.000000e+00> : vector<256x128xf32>
    %2 = tpu.matmul %0, %1, %cst {dimension_numbers = #tpu.dot_dimension_numbers<[1], [0], [0], [1], [0, 0, 1, 1], [], []>} : vector<256x8xbf16>, vector<8x128xbf16>, vector<256x128xf32> -> vector<256x128xf32>
    %c0_3 = arith.constant 0 : index
    %c0_4 = arith.constant 0 : index
    %3 = vector.load %arg3[%c0_3, %c0_4] : memref<1x128xf32, #tpu.memory_space<vmem>>, vector<1x128xf32>
    %4 = vector.broadcast %3 : vector<1x128xf32> to vector<256x128xf32>
    %5 = arith.addf %2, %4 : vector<256x128xf32>
    %cst_5 = arith.constant 0.000000e+00 : f32
    %6 = vector.broadcast %cst_5 : f32 to vector<256x128xf32>
    %7 = arith.maximumf %5, %6 : vector<256x128xf32>
    %8 = arith.truncf %7 : vector<256x128xf32> to vector<256x128xbf16>
    %c0_6 = arith.constant 0 : index
    %c0_7 = arith.constant 0 : index
    %9 = vector.load %arg4[%c0_6, %c0_7] : memref<128x128xbf16, #tpu.memory_space<vmem>>, vector<128x128xbf16>
    %cst_8 = arith.constant dense<0.000000e+00> : vector<256x128xf32>
    %10 = tpu.matmul %8, %9, %cst_8 {dimension_numbers = #tpu.dot_dimension_numbers<[1], [0], [0], [1], [0, 0, 1, 1], [], []>} : vector<256x128xbf16>, vector<128x128xbf16>, vector<256x128xf32> -> vector<256x128xf32>
    %11 = arith.truncf %10 : vector<256x128xf32> to vector<256x128xbf16>
    %c0_9 = arith.constant 0 : index
    %c0_10 = arith.constant 0 : index
    %12 = vector.load %arg5[%c0_9, %c0_10] : memref<256x128xbf16, #tpu.memory_space<vmem>>, vector<256x128xbf16>
    tpu.vector_store %arg5[%c0_9, %c0_10], %11 {strides = array<i32>} : memref<256x128xbf16, #tpu.memory_space<vmem>>, vector<256x128xbf16>,
    return
  }
  func.func @transform_0(%arg0: i32) -> (i32, i32) {
    %c0_i32 = arith.constant 0 : i32
    %c0_i32_0 = arith.constant 0 : i32
    return %arg0, %c0_i32 : i32, i32
  }
  func.func @transform_1(%arg0: i32) -> (i32, i32) {
    %c0_i32 = arith.constant 0 : i32
    %c0_i32_0 = arith.constant 0 : i32
    %c0_i32_1 = arith.constant 0 : i32
    return %c0_i32, %c0_i32_0 : i32, i32
  }
  func.func @transform_2(%arg0: i32) -> (i32, i32) {
    %c0_i32 = arith.constant 0 : i32
    %c0_i32_0 = arith.constant 0 : i32
    %c0_i32_1 = arith.constant 0 : i32
    return %c0_i32, %c0_i32_0 : i32, i32
  }
  func.func @transform_3(%arg0: i32) -> (i32, i32) {
    %c0_i32 = arith.constant 0 : i32
    %c0_i32_0 = arith.constant 0 : i32
    %c0_i32_1 = arith.constant 0 : i32
    return %c0_i32, %c0_i32_0 : i32, i32
  }
  func.func @transform_4(%arg0: i32) -> (i32, i32) {
    %c0_i32 = arith.constant 0 : i32
    %c0_i32_0 = arith.constant 0 : i32
    return %arg0, %c0_i32 : i32, i32
  }
}

</mosaic_0001>

<llo_original>
// kernel: tpu_custom_call.1
$region0: #{tpu_custom_call.1}
  #allocation0 [shape = 'u32[]', space=smem, size = 0x4, offset = 0x4, fixed_abs, tag = 'smem constant byte address 0x4 - core index']
  #allocation1 [shape = 'u32[72,128]{1,0:T(1,128)}', space=vmem, size = 0x9000, scoped, tag = 'internal scratch']
  %s0 = inlined_call_operand.vmem [shape: bf16[256,8], index: 0, kind: input, shape index: {}]
  %s1 = inlined_call_operand.vmem [shape: bf16[8,128], index: 1, kind: input, shape index: {}]
  %s2 = inlined_call_operand.vmem [shape: f32[1,128], index: 2, kind: input, shape index: {}]
  %s3 = inlined_call_operand.vmem [shape: bf16[128,128], index: 3, kind: input, shape index: {}]
  %s4 = inlined_call_operand.hbm [shape: bf16[256,128], index: 4, kind: output, shape index: {}]
  %s5 = sld [smem:[#allocation0]]
  $region26: #{tpu_custom_call.1} parent=0
    _
  %s7 = ssub.s32 1, %s5
  %s8 = scalar_select 0, %s7, %s5
  $region1: #{tpu_custom_call.1} parent=0
    #allocation2 [shape = 'u8[65536]{0}', space=vmem, size = 0x10000, scoped, tag = 'output window, operand 0, single buffered']
    #allocation3 [shape = 's32[1]{0}', space=sflag, size = 0x4, scoped, tag = 'scoped memory for tpu_custom_call.1']
    %9 = vsyncpa [#allocation3], 0
    // Predicated region
    $region2: #{tpu_custom_call.1} parent=1 // pred_check
      _
    $region3: #{tpu_custom_call.1} parent=1 // pred_check_branch
      %11 = sbr.rel (0) target = $region5
    $region4: #{tpu_custom_call.1} parent=1 // pred_region
      _
    $region5: #{tpu_custom_call.1} parent=1 // pred_fallthru
      _
    // Predicated region
    $region6: #{tpu_custom_call.1} parent=1 // pred_check
      _
    $region7: #{tpu_custom_call.1} parent=1 // pred_check_branch
      %13 = sbr.rel (0) target = $region9
    $region8: #{tpu_custom_call.1} parent=1 // pred_region
      _
    $region9: #{tpu_custom_call.1} parent=1 // pred_fallthru
      _
    // Predicated region
    $region10: #{tpu_custom_call.1} parent=1 // pred_check
      _
    $region11: #{tpu_custom_call.1} parent=1 // pred_check_branch
      %15 = sbr.rel (0) target = $region13
    $region12: #{tpu_custom_call.1} parent=1 // pred_region
      _
    $region13: #{tpu_custom_call.1} parent=1 // pred_fallthru
      _
    // Predicated region
    $region14: #{tpu_custom_call.1} parent=1 // pred_check
      _
    $region15: #{tpu_custom_call.1} parent=1 // pred_check_branch
      %17 = sbr.rel (0) target = $region17
    $region16: #{tpu_custom_call.1} parent=1 // pred_region
      _
    $region17: #{tpu_custom_call.1} parent=1 // pred_fallthru
      _
    %v19 = vld [vmem:[%s0] sm:$0xf]
    %v20 = vld [vmem:[%s0 + $0x4] sm:$0xf]
    %v21 = vld [vmem:[%s0 + $0x8] sm:$0xf]
    %v22 = vld [vmem:[%s0 + $0xc] sm:$0xf]
    %v23 = vld [vmem:[%s0 + $0x10] sm:$0xf]
    %v24 = vld [vmem:[%s0 + $0x14] sm:$0xf]
    %v25 = vld [vmem:[%s0 + $0x18] sm:$0xf]
    %v26 = vld [vmem:[%s0 + $0x1c] sm:$0xf]
    %v27 = vld [vmem:[%s0 + $0x20] sm:$0xf]
    %v28 = vld [vmem:[%s0 + $0x24] sm:$0xf]
    %v29 = vld [vmem:[%s0 + $0x28] sm:$0xf]
    %v30 = vld [vmem:[%s0 + $0x2c] sm:$0xf]
    %v31 = vld [vmem:[%s0 + $0x30] sm:$0xf]
    %v32 = vld [vmem:[%s0 + $0x34] sm:$0xf]
    %v33 = vld [vmem:[%s0 + $0x38] sm:$0xf]
    %v34 = vld [vmem:[%s0 + $0x3c] sm:$0xf]
    %v35 = vld [vmem:[%s0 + $0x40] sm:$0xf]
    %v36 = vld [vmem:[%s0 + $0x44] sm:$0xf]
    %v37 = vld [vmem:[%s0 + $0x48] sm:$0xf]
    %v38 = vld [vmem:[%s0 + $0x4c] sm:$0xf]
    %v39 = vld [vmem:[%s0 + $0x50] sm:$0xf]
    %v40 = vld [vmem:[%s0 + $0x54] sm:$0xf]
    %v41 = vld [vmem:[%s0 + $0x58] sm:$0xf]
    %v42 = vld [vmem:[%s0 + $0x5c] sm:$0xf]
    %v43 = vld [vmem:[%s0 + $0x60] sm:$0xf]
    %v44 = vld [vmem:[%s0 + $0x64] sm:$0xf]
    %v45 = vld [vmem:[%s0 + $0x68] sm:$0xf]
    %v46 = vld [vmem:[%s0 + $0x6c] sm:$0xf]
    %v47 = vld [vmem:[%s0 + $0x70] sm:$0xf]
    %v48 = vld [vmem:[%s0 + $0x74] sm:$0xf]
    %v49 = vld [vmem:[%s0 + $0x78] sm:$0xf]
    %v50 = vld [vmem:[%s0 + $0x7c] sm:$0xf]
    %v51 = vld [vmem:[%s1] sm:$0xf]
    %v52 = vld [vmem:[%s2] sm:$0x1]
    %v54 = vperm.slane %v52, 0
    %v88 = vunpack.c.l.b16 %v19
    %v89 = vunpack.c.l.b16 %v20
    %v90 = vunpack.c.l.b16 %v21
    %v91 = vunpack.c.l.b16 %v22
    %v92 = vunpack.c.l.b16 %v23
    %v93 = vunpack.c.l.b16 %v24
    %v94 = vunpack.c.l.b16 %v25
    %v95 = vunpack.c.l.b16 %v26
    %v96 = vunpack.c.l.b16 %v27
    %v97 = vunpack.c.l.b16 %v28
    %v98 = vunpack.c.l.b16 %v29
    %v99 = vunpack.c.l.b16 %v30
    %v100 = vunpack.c.l.b16 %v31
    %v101 = vunpack.c.l.b16 %v32
    %v102 = vunpack.c.l.b16 %v33
    %v103 = vunpack.c.l.b16 %v34
    %v104 = vunpack.c.l.b16 %v35
    %v105 = vunpack.c.l.b16 %v36
    %v106 = vunpack.c.l.b16 %v37
    %v107 = vunpack.c.l.b16 %v38
    %v108 = vunpack.c.l.b16 %v39
    %v109 = vunpack.c.l.b16 %v40
    %v110 = vunpack.c.l.b16 %v41
    %v111 = vunpack.c.l.b16 %v42
    %v112 = vunpack.c.l.b16 %v43
    %v113 = vunpack.c.l.b16 %v44
    %v114 = vunpack.c.l.b16 %v45
    %v115 = vunpack.c.l.b16 %v46
    %v116 = vunpack.c.l.b16 %v47
    %v117 = vunpack.c.l.b16 %v48
    %v118 = vunpack.c.l.b16 %v49
    %v119 = vunpack.c.l.b16 %v50
    %v120 = vpack.c.b16 %v89, %v88
    %v121 = vpack.c.b16 %v91, %v90
    %v122 = vpack.c.b16 %v93, %v92
    %v123 = vpack.c.b16 %v95, %v94
    %v124 = vpack.c.b16 %v97, %v96
    %v125 = vpack.c.b16 %v99, %v98
    %v126 = vpack.c.b16 %v101, %v100
    %v127 = vpack.c.b16 %v103, %v102
    %v128 = vpack.c.b16 %v105, %v104
    %v129 = vpack.c.b16 %v107, %v106
    %v130 = vpack.c.b16 %v109, %v108
    %v131 = vpack.c.b16 %v111, %v110
    %v132 = vpack.c.b16 %v113, %v112
    %v133 = vpack.c.b16 %v115, %v114
    %v134 = vpack.c.b16 %v117, %v116
    %v135 = vpack.c.b16 %v119, %v118
    %vm136 = vcmask 64512
    %v138 = vsel %vm136, %v120, 0
    %v141 = vsel %vm136, %v121, 0
    %v144 = vsel %vm136, %v122, 0
    %v147 = vsel %vm136, %v123, 0
    %v150 = vsel %vm136, %v124, 0
    %v153 = vsel %vm136, %v125, 0
    %v156 = vsel %vm136, %v126, 0
    %v159 = vsel %vm136, %v127, 0
    %v162 = vsel %vm136, %v128, 0
    %v165 = vsel %vm136, %v129, 0
    %v168 = vsel %vm136, %v130, 0
    %v171 = vsel %vm136, %v131, 0
    %v174 = vsel %vm136, %v132, 0
    %v177 = vsel %vm136, %v133, 0
    %v180 = vsel %vm136, %v134, 0
    %v183 = vsel %vm136, %v135, 0
    %vm185 = vcmask 1043456
    %v187 = vsel %vm185, %v51, 0
    %189 = vmatpush.bf16.msra.mxu0 0
    %190 = vmatpush.bf16.msra.mxu0 0
    %191 = vmatpush.bf16.msra.mxu0 0
    %192 = vmatpush.bf16.msra.mxu0 0
    %193 = vmatpush.bf16.msra.mxu0 0
    %194 = vmatpush.bf16.msra.mxu0 0
    %195 = vmatpush.bf16.msra.mxu0 0
    %196 = vmatpush.bf16.msra.mxu0 %v187
    %197 = vmatmul.bf16.gmra.mxu0 %v138
    %v198 = vpop.f32.mrf.mxu0
    %v199 = vadd.f32 %v54, %v198
    %v200 = vpop.f32.mrf.mxu0
    %v201 = vadd.f32 %v54, %v200
    %202 = vmatmul.bf16.gmra.mxu0 %v141
    %v203 = vpop.f32.mrf.mxu0
    %v204 = vadd.f32 %v54, %v203
    %v205 = vpop.f32.mrf.mxu0
    %v206 = vadd.f32 %v54, %v205
    %207 = vmatmul.bf16.gmra.mxu0 %v144
    %v208 = vpop.f32.mrf.mxu0
    %v209 = vadd.f32 %v54, %v208
    %v210 = vpop.f32.mrf.mxu0
    %v211 = vadd.f32 %v54, %v210
    %212 = vmatmul.bf16.gmra.mxu0 %v147
    %v213 = vpop.f32.mrf.mxu0
    %v214 = vadd.f32 %v54, %v213
    %v215 = vpop.f32.mrf.mxu0
    %v216 = vadd.f32 %v54, %v215
    %217 = vmatmul.bf16.gmra.mxu0 %v150
    %v218 = vpop.f32.mrf.mxu0
    %v219 = vadd.f32 %v54, %v218
    %v220 = vpop.f32.mrf.mxu0
    %v221 = vadd.f32 %v54, %v220
    %222 = vmatmul.bf16.gmra.mxu0 %v153
    %v223 = vpop.f32.mrf.mxu0
    %v224 = vadd.f32 %v54, %v223
    %v225 = vpop.f32.mrf.mxu0
    %v226 = vadd.f32 %v54, %v225
    %227 = vmatmul.bf16.gmra.mxu0 %v156
    %v228 = vpop.f32.mrf.mxu0
    %v229 = vadd.f32 %v54, %v228
    %v230 = vpop.f32.mrf.mxu0
    %v231 = vadd.f32 %v54, %v230
    %232 = vmatmul.bf16.gmra.mxu0 %v159
    %v233 = vpop.f32.mrf.mxu0
    %v234 = vadd.f32 %v54, %v233
    %v235 = vpop.f32.mrf.mxu0
    %v236 = vadd.f32 %v54, %v235
    %237 = vmatmul.bf16.gmra.mxu0 %v162
    %v238 = vpop.f32.mrf.mxu0
    %v239 = vadd.f32 %v54, %v238
    %v240 = vpop.f32.mrf.mxu0
    %v241 = vadd.f32 %v54, %v240
    %242 = vmatmul.bf16.gmra.mxu0 %v165
    %v243 = vpop.f32.mrf.mxu0
    %v244 = vadd.f32 %v54, %v243
    %v245 = vpop.f32.mrf.mxu0
    %v246 = vadd.f32 %v54, %v245
    %247 = vmatmul.bf16.gmra.mxu0 %v168
    %v248 = vpop.f32.mrf.mxu0
    %v249 = vadd.f32 %v54, %v248
    %v250 = vpop.f32.mrf.mxu0
    %v251 = vadd.f32 %v54, %v250
    %252 = vmatmul.bf16.gmra.mxu0 %v171
    %v253 = vpop.f32.mrf.mxu0
    %v254 = vadd.f32 %v54, %v253
    %v255 = vpop.f32.mrf.mxu0
    %v256 = vadd.f32 %v54, %v255
    %257 = vmatmul.bf16.gmra.mxu0 %v174
    %v258 = vpop.f32.mrf.mxu0
    %v259 = vadd.f32 %v54, %v258
    %v260 = vpop.f32.mrf.mxu0
    %v261 = vadd.f32 %v54, %v260
    %262 = vmatmul.bf16.gmra.mxu0 %v177
    %v263 = vpop.f32.mrf.mxu0
    %v264 = vadd.f32 %v54, %v263
    %v265 = vpop.f32.mrf.mxu0
    %v266 = vadd.f32 %v54, %v265
    %267 = vmatmul.bf16.gmra.mxu0 %v180
    %v268 = vpop.f32.mrf.mxu0
    %v269 = vadd.f32 %v54, %v268
    %v270 = vpop.f32.mrf.mxu0
    %v271 = vadd.f32 %v54, %v270
    %272 = vmatmul.bf16.gmra.mxu0 %v183
    %v273 = vpop.f32.mrf.mxu0
    %v274 = vadd.f32 %v54, %v273
    %v275 = vpop.f32.mrf.mxu0
    %v276 = vadd.f32 %v54, %v275
    %277 = vdwg.mxu0
    %v278 = vmax.f32 %v199, 0.0
    %v279 = vmax.f32 %v201, 0.0
    %v280 = vmax.f32 %v204, 0.0
    %v281 = vmax.f32 %v206, 0.0
    %v282 = vmax.f32 %v209, 0.0
    %v283 = vmax.f32 %v211, 0.0
    %v284 = vmax.f32 %v214, 0.0
    %v285 = vmax.f32 %v216, 0.0
    %v286 = vmax.f32 %v219, 0.0
    %v287 = vmax.f32 %v221, 0.0
    %v288 = vmax.f32 %v224, 0.0
    %v289 = vmax.f32 %v226, 0.0
    %v290 = vmax.f32 %v229, 0.0
    %v291 = vmax.f32 %v231, 0.0
    %v292 = vmax.f32 %v234, 0.0
    %v293 = vmax.f32 %v236, 0.0
    %v294 = vmax.f32 %v239, 0.0
    %v295 = vmax.f32 %v241, 0.0
    %v296 = vmax.f32 %v244, 0.0
    %v297 = vmax.f32 %v246, 0.0
    %v298 = vmax.f32 %v249, 0.0
    %v299 = vmax.f32 %v251, 0.0
    %v300 = vmax.f32 %v254, 0.0
    %v301 = vmax.f32 %v256, 0.0
    %v302 = vmax.f32 %v259, 0.0
    %v303 = vmax.f32 %v261, 0.0
    %v304 = vmax.f32 %v264, 0.0
    %v305 = vmax.f32 %v266, 0.0
    %v306 = vmax.f32 %v269, 0.0
    %v307 = vmax.f32 %v271, 0.0
    %v308 = vmax.f32 %v274, 0.0
    %v309 = vmax.f32 %v276, 0.0
    %v310 = vpack.c.bf16 %v279, %v278
    %v311 = vpack.c.bf16 %v281, %v280
    %v312 = vpack.c.bf16 %v283, %v282
    %v313 = vpack.c.bf16 %v285, %v284
    %v314 = vpack.c.bf16 %v287, %v286
    %v315 = vpack.c.bf16 %v289, %v288
    %v316 = vpack.c.bf16 %v291, %v290
    %v317 = vpack.c.bf16 %v293, %v292
    %v318 = vpack.c.bf16 %v295, %v294
    %v319 = vpack.c.bf16 %v297, %v296
    %v320 = vpack.c.bf16 %v299, %v298
    %v321 = vpack.c.bf16 %v301, %v300
    %v322 = vpack.c.bf16 %v303, %v302
    %v323 = vpack.c.bf16 %v305, %v304
    %v324 = vpack.c.bf16 %v307, %v306
    %v325 = vpack.c.bf16 %v309, %v308
    %v326 = vld [vmem:[%s3] sm:$0xf]
    %v327 = vld [vmem:[%s3 + $0x4] sm:$0xf]
    %v328 = vld [vmem:[%s3 + $0x8] sm:$0xf]
    %v329 = vld [vmem:[%s3 + $0xc] sm:$0xf]
    %v330 = vld [vmem:[%s3 + $0x10] sm:$0xf]
    %v331 = vld [vmem:[%s3 + $0x14] sm:$0xf]
    %v332 = vld [vmem:[%s3 + $0x18] sm:$0xf]
    %v333 = vld [vmem:[%s3 + $0x1c] sm:$0xf]
    %v334 = vld [vmem:[%s3 + $0x20] sm:$0xf]
    %v335 = vld [vmem:[%s3 + $0x24] sm:$0xf]
    %v336 = vld [vmem:[%s3 + $0x28] sm:$0xf]
    %v337 = vld [vmem:[%s3 + $0x2c] sm:$0xf]
    %v338 = vld [vmem:[%s3 + $0x30] sm:$0xf]
    %v339 = vld [vmem:[%s3 + $0x34] sm:$0xf]
    %v340 = vld [vmem:[%s3 + $0x38] sm:$0xf]
    %v341 = vld [vmem:[%s3 + $0x3c] sm:$0xf]
    %v358 = vunpack.c.l.b16 %v326
    %v359 = vunpack.c.l.b16 %v327
    %v360 = vunpack.c.l.b16 %v328
    %v361 = vunpack.c.l.b16 %v329
    %v362 = vunpack.c.l.b16 %v330
    %v363 = vunpack.c.l.b16 %v331
    %v364 = vunpack.c.l.b16 %v332
    %v365 = vunpack.c.l.b16 %v333
    %v366 = vunpack.c.l.b16 %v334
    %v367 = vunpack.c.l.b16 %v335
    %v368 = vunpack.c.l.b16 %v336
    %v369 = vunpack.c.l.b16 %v337
    %v370 = vunpack.c.l.b16 %v338
    %v371 = vunpack.c.l.b16 %v339
    %v372 = vunpack.c.l.b16 %v340
    %v373 = vunpack.c.l.b16 %v341
    %v374 = vpack.c.b16 %v359, %v358
    %v375 = vpack.c.b16 %v361, %v360
    %v376 = vpack.c.b16 %v363, %v362
    %v377 = vpack.c.b16 %v365, %v364
    %v378 = vpack.c.b16 %v367, %v366
    %v379 = vpack.c.b16 %v369, %v368
    %v380 = vpack.c.b16 %v371, %v370
    %v381 = vpack.c.b16 %v373, %v372
    %390 = vmatpush.bf16.msra.mxu0 %v381
    %391 = vmatpush.bf16.msra.mxu0 %v380
    %392 = vmatpush.bf16.msra.mxu0 %v379
    %393 = vmatpush.bf16.msra.mxu0 %v378
    %394 = vmatpush.bf16.msra.mxu0 %v377
    %395 = vmatpush.bf16.msra.mxu0 %v376
    %396 = vmatpush.bf16.msra.mxu0 %v375
    %397 = vmatpush.bf16.msra.mxu0 %v374
    %398 = vmatmul.bf16.gmra.mxu0 %v310
    %v399 = vpop.f32.mrf.mxu0
    %v400 = vadd.f32 0.0, %v399
    %v401 = vpop.f32.mrf.mxu0
    %v402 = vadd.f32 0.0, %v401
    %403 = vmatmul.bf16.gmra.mxu0 %v311
    %v404 = vpop.f32.mrf.mxu0
    %v405 = vadd.f32 0.0, %v404
    %v406 = vpop.f32.mrf.mxu0
    %v407 = vadd.f32 0.0, %v406
    %408 = vmatmul.bf16.gmra.mxu0 %v312
    %v409 = vpop.f32.mrf.mxu0
    %v410 = vadd.f32 0.0, %v409
    %v411 = vpop.f32.mrf.mxu0
    %v412 = vadd.f32 0.0, %v411
    %413 = vmatmul.bf16.gmra.mxu0 %v313
    %v414 = vpop.f32.mrf.mxu0
    %v415 = vadd.f32 0.0, %v414
    %v416 = vpop.f32.mrf.mxu0
    %v417 = vadd.f32 0.0, %v416
    %418 = vmatmul.bf16.gmra.mxu0 %v314
    %v419 = vpop.f32.mrf.mxu0
    %v420 = vadd.f32 0.0, %v419
    %v421 = vpop.f32.mrf.mxu0
    %v422 = vadd.f32 0.0, %v421
    %423 = vmatmul.bf16.gmra.mxu0 %v315
    %v424 = vpop.f32.mrf.mxu0
    %v425 = vadd.f32 0.0, %v424
    %v426 = vpop.f32.mrf.mxu0
    %v427 = vadd.f32 0.0, %v426
    %428 = vmatmul.bf16.gmra.mxu0 %v316
    %v429 = vpop.f32.mrf.mxu0
    %v430 = vadd.f32 0.0, %v429
    %v431 = vpop.f32.mrf.mxu0
    %v432 = vadd.f32 0.0, %v431
    %433 = vmatmul.bf16.gmra.mxu0 %v317
    %v434 = vpop.f32.mrf.mxu0
    %v435 = vadd.f32 0.0, %v434
    %v436 = vpop.f32.mrf.mxu0
    %v437 = vadd.f32 0.0, %v436
    %438 = vmatmul.bf16.gmra.mxu0 %v318
    %v439 = vpop.f32.mrf.mxu0
    %v440 = vadd.f32 0.0, %v439
    %v441 = vpop.f32.mrf.mxu0
    %v442 = vadd.f32 0.0, %v441
    %443 = vmatmul.bf16.gmra.mxu0 %v319
    %v444 = vpop.f32.mrf.mxu0
    %v445 = vadd.f32 0.0, %v444
    %v446 = vpop.f32.mrf.mxu0
    %v447 = vadd.f32 0.0, %v446
    %448 = vmatmul.bf16.gmra.mxu0 %v320
    %v449 = vpop.f32.mrf.mxu0
    %v450 = vadd.f32 0.0, %v449
    %v451 = vpop.f32.mrf.mxu0
    %v452 = vadd.f32 0.0, %v451
    %453 = vmatmul.bf16.gmra.mxu0 %v321
    %v454 = vpop.f32.mrf.mxu0
    %v455 = vadd.f32 0.0, %v454
    %v456 = vpop.f32.mrf.mxu0
    %v457 = vadd.f32 0.0, %v456
    %458 = vmatmul.bf16.gmra.mxu0 %v322
    %v459 = vpop.f32.mrf.mxu0
    %v460 = vadd.f32 0.0, %v459
    %v461 = vpop.f32.mrf.mxu0
    %v462 = vadd.f32 0.0, %v461
    %463 = vmatmul.bf16.gmra.mxu0 %v323
    %v464 = vpop.f32.mrf.mxu0
    %v465 = vadd.f32 0.0, %v464
    %v466 = vpop.f32.mrf.mxu0
    %v467 = vadd.f32 0.0, %v466
    %468 = vmatmul.bf16.gmra.mxu0 %v324
    %v469 = vpop.f32.mrf.mxu0
    %v470 = vadd.f32 0.0, %v469
    %v471 = vpop.f32.mrf.mxu0
    %v472 = vadd.f32 0.0, %v471
    %473 = vmatmul.bf16.gmra.mxu0 %v325
    %v474 = vpop.f32.mrf.mxu0
    %v475 = vadd.f32 0.0, %v474
    %v476 = vpop.f32.mrf.mxu0
    %v477 = vadd.f32 0.0, %v476
    %478 = vdwg.mxu0
    %v479 = vpack.c.bf16 %v400, %v400
    %v480 = vpack.c.bf16 %v402, %v402
    %v481 = vpack.c.bf16 %v405, %v405
    %v482 = vpack.c.bf16 %v407, %v407
    %v483 = vpack.c.bf16 %v410, %v410
    %v484 = vpack.c.bf16 %v412, %v412
    %v485 = vpack.c.bf16 %v415, %v415
    %v486 = vpack.c.bf16 %v417, %v417
    %v487 = vpack.c.bf16 %v420, %v420
    %v488 = vpack.c.bf16 %v422, %v422
    %v489 = vpack.c.bf16 %v425, %v425
    %v490 = vpack.c.bf16 %v427, %v427
    %v491 = vpack.c.bf16 %v430, %v430
    %v492 = vpack.c.bf16 %v432, %v432
    %v493 = vpack.c.bf16 %v435, %v435
    %v494 = vpack.c.bf16 %v437, %v437
    %v495 = vpack.c.bf16 %v440, %v440
    %v496 = vpack.c.bf16 %v442, %v442
    %v497 = vpack.c.bf16 %v445, %v445
    %v498 = vpack.c.bf16 %v447, %v447
    %v499 = vpack.c.bf16 %v450, %v450
    %v500 = vpack.c.bf16 %v452, %v452
    %v501 = vpack.c.bf16 %v455, %v455
    %v502 = vpack.c.bf16 %v457, %v457
    %v503 = vpack.c.bf16 %v460, %v460
    %v504 = vpack.c.bf16 %v462, %v462
    %v505 = vpack.c.bf16 %v465, %v465
    %v506 = vpack.c.bf16 %v467, %v467
    %v507 = vpack.c.bf16 %v470, %v470
    %v508 = vpack.c.bf16 %v472, %v472
    %v509 = vpack.c.bf16 %v475, %v475
    %v510 = vpack.c.bf16 %v477, %v477
    %511 = vst [vmem:[#allocation2] sm:$0xf] %v479
    %512 = vst [vmem:[#allocation2 + $0x4] sm:$0xf] %v480
    %513 = vst [vmem:[#allocation2 + $0x8] sm:$0xf] %v481
    %514 = vst [vmem:[#allocation2 + $0xc] sm:$0xf] %v482
    %515 = vst [vmem:[#allocation2 + $0x10] sm:$0xf] %v483
    %516 = vst [vmem:[#allocation2 + $0x14] sm:$0xf] %v484
    %517 = vst [vmem:[#allocation2 + $0x18] sm:$0xf] %v485
    %518 = vst [vmem:[#allocation2 + $0x1c] sm:$0xf] %v486
    %519 = vst [vmem:[#allocation2 + $0x20] sm:$0xf] %v487
    %520 = vst [vmem:[#allocation2 + $0x24] sm:$0xf] %v488
    %521 = vst [vmem:[#allocation2 + $0x28] sm:$0xf] %v489
    %522 = vst [vmem:[#allocation2 + $0x2c] sm:$0xf] %v490
    %523 = vst [vmem:[#allocation2 + $0x30] sm:$0xf] %v491
    %524 = vst [vmem:[#allocation2 + $0x34] sm:$0xf] %v492
    %525 = vst [vmem:[#allocation2 + $0x38] sm:$0xf] %v493
    %526 = vst [vmem:[#allocation2 + $0x3c] sm:$0xf] %v494
    %527 = vst [vmem:[#allocation2 + $0x40] sm:$0xf] %v495
    %528 = vst [vmem:[#allocation2 + $0x44] sm:$0xf] %v496
    %529 = vst [vmem:[#allocation2 + $0x48] sm:$0xf] %v497
    %530 = vst [vmem:[#allocation2 + $0x4c] sm:$0xf] %v498
    %531 = vst [vmem:[#allocation2 + $0x50] sm:$0xf] %v499
    %532 = vst [vmem:[#allocation2 + $0x54] sm:$0xf] %v500
    %533 = vst [vmem:[#allocation2 + $0x58] sm:$0xf] %v501
    %534 = vst [vmem:[#allocation2 + $0x5c] sm:$0xf] %v502
    %535 = vst [vmem:[#allocation2 + $0x60] sm:$0xf] %v503
    %536 = vst [vmem:[#allocation2 + $0x64] sm:$0xf] %v504
    %537 = vst [vmem:[#allocation2 + $0x68] sm:$0xf] %v505
    %538 = vst [vmem:[#allocation2 + $0x6c] sm:$0xf] %v506
    %539 = vst [vmem:[#allocation2 + $0x70] sm:$0xf] %v507
    %540 = vst [vmem:[#allocation2 + $0x74] sm:$0xf] %v508
    %541 = vst [vmem:[#allocation2 + $0x78] sm:$0xf] %v509
    %542 = vst [vmem:[#allocation2 + $0x7c] sm:$0xf] %v510
    // Predicated region
    $region18: #{tpu_custom_call.1} parent=1 // pred_check
      _
    $region19: #{tpu_custom_call.1} parent=1 // pred_check_branch
      %544 = sbr.rel (0) target = $region21
    $region20: #{tpu_custom_call.1} parent=1 // pred_region
      %546 = vsyncadd [#allocation3], 0
      %s547 = sshll.u32 [#allocation2], 4
      %s548 = int_to_ptr.vmem [resolvable:$true] %s547
      %s549 = sshll.u32 %s4, 4
      %s550 = int_to_ptr.hbm [resolvable:$true] %s549
      %555 = dma.vmem_to_hbm [thread:$0]  %s548, 2048, %s550, [#allocation3], 64, 64, 4
    $region21: #{tpu_custom_call.1} parent=1 // pred_fallthru
      _
    // Predicated region
    $region22: #{tpu_custom_call.1} parent=1 // pred_check
      _
    $region23: #{tpu_custom_call.1} parent=1 // pred_check_branch
      %557 = sbr.rel (0) target = $region25
    $region24: #{tpu_custom_call.1} parent=1 // pred_region
      %559 = dma.done [#allocation3], 2048
    $region25: #{tpu_custom_call.1} parent=1 // pred_fallthru
      _
    %560 = vsyncpa [#allocation3], 1

</llo_original>
